<compile_context>
chip_gen: v5e
topology: v5e:2x2
jax: 0.10.0
libtpu: 0.0.40
codegen_flags: <defaults>
</compile_context>

<pallas_src>
import math

import jax
import jax.numpy as jnp
from jax.experimental import pallas as pl
from jax.experimental.pallas import tpu as pltpu


def _chomp_kernel(x_ref, o_ref):
    # x_ref : (row_tile, L) or (row_tile, L_out)  input block in VMEM
    # o_ref : (row_tile, L_out)                   output block in VMEM
    l_out = o_ref.shape[1]
    # If the chomp was already done by the input BlockSpec this slice is the
    # full extent (a no-op); otherwise it is a static lane slice in VMEM.
    o_ref[...] = x_ref[:, :l_out]


def chomp1d(x: jax.Array, chomp_size: int) -> jax.Array:
    """Pallas implementation of Chomp1d.forward: x[..., :-chomp_size]."""
    assert chomp_size > 0, "chomp_size must be positive"
    *lead, l = x.shape
    l_out = l - chomp_size
    assert l_out > 0, "chomp_size must be smaller than the sequence length"

    # Flatten leading (N, C, ...) axes -> dense sublane packing.
    r = math.prod(lead) if lead else 1
    x2 = x.reshape(r, l)

    itemsize = jnp.dtype(x.dtype).itemsize
    # Sublane packing multiple: 8 for 32-bit, 16 for 16-bit, 32 for 8-bit.
    min_rows = max(8, 32 // itemsize)

    # ~2 MiB input block => (2 in + 2 out) double-buffered stays well under
    # the scoped VMEM limit on v5e/v6e/v7x while amortizing per-step overhead.
    target_bytes = 2 * 1024 * 1024
    rows_for_budget = max(1, target_bytes // (l * itemsize))
    row_tile = max(min_rows, (rows_for_budget // min_rows) * min_rows)
    if row_tile >= r:
        row_tile = r  # single row-block; full-extent dim is always legal

    num_row_blocks = pl.cdiv(r, row_tile)

    # Chomp in the BlockSpec (skip DMA of the tail) when the lane dim stays
    # 128-aligned; otherwise read full L and slice in-kernel.
    if l_out % 128 == 0:
        in_last = l_out
    else:
        in_last = l

    y2 = pl.pallas_call(
        _chomp_kernel,
        out_shape=jax.ShapeDtypeStruct((r, l_out), x.dtype),
        grid=(num_row_blocks,),
        in_specs=[pl.BlockSpec((row_tile, in_last), lambda i: (i, 0))],
        out_specs=pl.BlockSpec((row_tile, l_out), lambda i: (i, 0)),
        compiler_params=pltpu.CompilerParams(
            dimension_semantics=("parallel",),
        ),
    )(x2)

    return y2.reshape(*lead, l_out)


if __name__ == "__main__":
    key = jax.random.PRNGKey(0)

    # Test 1: small TCN-like activation (unaligned L_out -> in-kernel slice).
    N, C, L = 2, 4, 16
    chomp_size = 3
    x = jax.random.normal(key, (N, C, L), dtype=jnp.float32)
    y = jax.block_until_ready(chomp1d(x, chomp_size))
    y_ref = x[:, :, :-chomp_size]
    assert y.shape == (N, C, L - chomp_size)
    assert y.dtype == x.dtype
    assert jnp.array_equal(y, y_ref)

    # Test 2: lane-aligned L_out -> chomp happens in the input BlockSpec
    # (tail never read from HBM), kernel body is a straight copy.
    key2 = jax.random.PRNGKey(1)
    N2, C2, L2, chomp2 = 2, 8, 640, 128   # L_out = 512, multiple of 128
    x2 = jax.random.normal(key2, (N2, C2, L2), dtype=jnp.float32)
    y2 = jax.block_until_ready(chomp1d(x2, chomp2))
    assert y2.shape == (N2, C2, L2 - chomp2)
    assert jnp.array_equal(y2, x2[:, :, :-chomp2])

    print("KERNEL_OK")
</pallas_src>

<mosaic_0001>
module attributes {stable_mosaic.version = 11 : i64} {
  func.func @_chomp_kernel(%arg0: i32, %arg1: memref<8x16xf32, #tpu.memory_space<vmem>>, %arg2: memref<8x13xf32, #tpu.memory_space<vmem>>) attributes {dimension_semantics = [#tpu.dimension_semantics<parallel>], iteration_bounds = array<i64: 1>, scalar_prefetch = 0 : i64, scratch_operands = 0 : i64, tpu.core_type = #tpu.core_type<tc>, window_params = [{transform_indices = @transform_0, window_bounds = array<i64: 8, 16>}, {transform_indices = @transform_1, window_bounds = array<i64: 8, 13>}]} {
    %c0 = arith.constant 0 : index
    %c0_0 = arith.constant 0 : index
    %0 = vector.load %arg1[%c0, %c0_0] : memref<8x16xf32, #tpu.memory_space<vmem>>, vector<8x13xf32>
    %c0_1 = arith.constant 0 : index
    %c0_2 = arith.constant 0 : index
    %1 = vector.load %arg2[%c0_1, %c0_2] : memref<8x13xf32, #tpu.memory_space<vmem>>, vector<8x13xf32>
    tpu.vector_store %arg2[%c0_1, %c0_2], %0 {strides = array<i32>} : memref<8x13xf32, #tpu.memory_space<vmem>>, vector<8x13xf32>,
    return
  }
  func.func @transform_0(%arg0: i32) -> (i32, i32) {
    %c0_i32 = arith.constant 0 : i32
    %c0_i32_0 = arith.constant 0 : i32
    return %arg0, %c0_i32 : i32, i32
  }
  func.func @transform_1(%arg0: i32) -> (i32, i32) {
    %c0_i32 = arith.constant 0 : i32
    %c0_i32_0 = arith.constant 0 : i32
    return %arg0, %c0_i32 : i32, i32
  }
}

</mosaic_0001>

<llo_original>
// kernel: tpu_custom_call.1
$region0: #{tpu_custom_call.1}
  #allocation0 [shape = 'u32[]', space=smem, size = 0x4, offset = 0x4, fixed_abs, tag = 'smem constant byte address 0x4 - core index']
  #allocation1 [shape = 'u32[72,128]{1,0:T(1,128)}', space=vmem, size = 0x9000, scoped, tag = 'internal scratch']
  %s0 = inlined_call_operand.hbm [shape: f32[8,16], index: 0, kind: input, shape index: {}]
  %s1 = inlined_call_operand.hbm [shape: f32[8,13], index: 1, kind: output, shape index: {}]
  %s2 = sld [smem:[#allocation0]]
  $region18: #{tpu_custom_call.1} parent=0
    _
  %s4 = ssub.s32 1, %s2
  %s5 = scalar_select 0, %s4, %s2
  $region1: #{tpu_custom_call.1} parent=0
    #allocation2 [shape = 'u8[4096]{0}', space=vmem, size = 0x1000, scoped, tag = 'input window, operand 0, single buffered']
    #allocation3 [shape = 's32[1]{0}', space=sflag, size = 0x4, scoped, tag = 'scoped memory for tpu_custom_call.1']
    #allocation4 [shape = 's32[1]{0}', space=sflag, size = 0x4, scoped, tag = 'scoped memory for tpu_custom_call.1']
    #allocation5 [shape = 'u8[4096]{0}', space=vmem, size = 0x1000, scoped, tag = 'output window, operand 0, single buffered']
    %6 = vsyncpa [#allocation3], 0
    %7 = vsyncpa [#allocation4], 0
    // Predicated region
    $region2: #{tpu_custom_call.1} parent=1 // pred_check
      _
    $region3: #{tpu_custom_call.1} parent=1 // pred_check_branch
      %9 = sbr.rel (0) target = $region5
    $region4: #{tpu_custom_call.1} parent=1 // pred_region
      %11 = vsyncadd [#allocation3], 0
      %s13 = sshll.u32 %s0, 4
      %s14 = int_to_ptr.hbm [resolvable:$true] %s13
      %s15 = sshll.u32 [#allocation2], 4
      %s16 = int_to_ptr.vmem [resolvable:$true] %s15
      %18 = dma.hbm_to_vmem [thread:$0]  %s14, 128, %s16, [#allocation3]
    $region5: #{tpu_custom_call.1} parent=1 // pred_fallthru
      _
    // Predicated region
    $region6: #{tpu_custom_call.1} parent=1 // pred_check
      _
    $region7: #{tpu_custom_call.1} parent=1 // pred_check_branch
      %20 = sbr.rel (0) target = $region9
    $region8: #{tpu_custom_call.1} parent=1 // pred_region
      %22 = dma.done [#allocation3], 128
    $region9: #{tpu_custom_call.1} parent=1 // pred_fallthru
      _
    %v23 = vld [vmem:[#allocation2] sm:$0xff]
    %vm24 = vcmask 105472
    %25 = vst.msk [vmem:[#allocation5] sm:$0xff] %vm24, %v23
    // Predicated region
    $region10: #{tpu_custom_call.1} parent=1 // pred_check
      _
    $region11: #{tpu_custom_call.1} parent=1 // pred_check_branch
      %27 = sbr.rel (0) target = $region13
    $region12: #{tpu_custom_call.1} parent=1 // pred_region
      %29 = vsyncadd [#allocation4], 0
      %s31 = sshll.u32 [#allocation5], 4
      %s32 = int_to_ptr.vmem [resolvable:$true] %s31
      %s33 = sshll.u32 %s1, 4
      %s34 = int_to_ptr.hbm [resolvable:$true] %s33
      %36 = dma.vmem_to_hbm [thread:$0]  %s32, 128, %s34, [#allocation4]
    $region13: #{tpu_custom_call.1} parent=1 // pred_fallthru
      _
    // Predicated region
    $region14: #{tpu_custom_call.1} parent=1 // pred_check
      _
    $region15: #{tpu_custom_call.1} parent=1 // pred_check_branch
      %38 = sbr.rel (0) target = $region17
    $region16: #{tpu_custom_call.1} parent=1 // pred_region
      %40 = dma.done [#allocation4], 128
    $region17: #{tpu_custom_call.1} parent=1 // pred_fallthru
      _
    %41 = vsyncpa [#allocation3], 1
    %42 = vsyncpa [#allocation4], 1

</llo_original>
